<compile_context>
chip_gen: v6e
topology: v6e:2x2x1
jax: 0.10.0
libtpu: 0.0.40
codegen_flags: <defaults>
</compile_context>

<pallas_src>
import functools
import math

import jax
import jax.numpy as jnp
from jax import lax
from jax.experimental import pallas as pl
from jax.experimental.pallas import tpu as pltpu

_BN_EPS = 1e-5
_LANE = 128

# Fixed SiamMLP head architecture:
#   Projector: Linear-BN-ReLU, Linear-BN-ReLU, Linear   (layers 0, 1, 2)
#   predictor: Linear-BN-ReLU, Linear                   (layers 3, 4)
_NUM_LAYERS = 5
_BN_LAYERS = (0, 1, 3)        # layers followed by BatchNorm1d + ReLU
_PROJ_LAYER = 2               # layer whose output is `projections`
_PRED_LAYER = 4               # layer whose output is `predictions`


def _round_up(n, m):
    return ((n + m - 1) // m) * m


# ------------------------------ Fused kernel ------------------------------- #

def _make_siam_head_kernel(batch):
    """Projector + predictor kernel; grid = (layer, output-column tile).

    Activations live in a ping-pong bf16 VMEM scratch for the whole grid.  Each
    grid step streams one (F_pad, tn) weight tile (auto double-buffered by the
    BlockSpec pipeline) and produces the matching tn output columns of the current
    layer.  BatchNorm is per-feature, so per-column-tile statistics over the batch
    are exact.
    """

    def kernel(feat_ref, w_ref, b_ref, g_ref, t_ref, proj_ref, pred_ref, acts_ref):
        l = pl.program_id(0)                    # layer index (sequential)
        j = pl.program_id(1)                    # output-column tile (sequential)
        tn = w_ref.shape[2]
        b_pad = acts_ref.shape[1]
        col = pl.multiple_of(j * tn, tn)

        # One-time: stage the (zero-padded) backbone features into ping-pong slot 0.
        @pl.when((l == 0) & (j == 0))
        def _():
            acts_ref[0] = feat_ref[...]

        # Ping-pong: even layers read slot 0 / write slot 1, odd layers the reverse.
        in_slot = l % 2
        x = acts_ref[in_slot]                   # (B_pad, F_pad) bf16 (padded cols = 0)

        # MXU: bf16 operands, f32 accumulation.
        h = jnp.dot(x, w_ref[0], preferred_element_type=jnp.float32)
        h = h + b_ref[0]        # bias row is zero for BN layers (cancelled by mean)

        # Training-mode BatchNorm1d, single pass: sum and sum-of-squares together,
        # biased variance, exact batch count (padded rows of h are zero).
        inv_b = 1.0 / float(batch)
        mean = jnp.sum(h, axis=0, keepdims=True) * inv_b
        msq = jnp.sum(h * h, axis=0, keepdims=True) * inv_b
        var = jnp.maximum(msq - mean * mean, 0.0)
        y = (h - mean) * (lax.rsqrt(var + _BN_EPS) * g_ref[0]) + t_ref[0]
        y = jnp.maximum(y, 0.0)                 # ReLU (only selected for BN layers)

        is_bn = l == _BN_LAYERS[0]
        for idx in _BN_LAYERS[1:]:
            is_bn = jnp.logical_or(is_bn, l == idx)

        # Re-zero padded batch rows (BN / bias un-zero them) so the next layer's
        # batch statistics stay exact.
        row_ids = lax.broadcasted_iota(jnp.int32, (b_pad, tn), 0)
        out = jnp.where(is_bn, y, h)
        out = jnp.where(row_ids < batch, out, 0.0)            # (B_pad, tn) f32

        out_act = out.astype(acts_ref.dtype)

        @pl.when(in_slot == 0)
        def _():
            acts_ref[1, :, pl.ds(col, tn)] = out_act

        @pl.when(in_slot == 1)
        def _():
            acts_ref[0, :, pl.ds(col, tn)] = out_act

        @pl.when(l == _PROJ_LAYER)
        def _():
            proj_ref[:, pl.ds(col, tn)] = out

        @pl.when(l == _PRED_LAYER)
        def _():
            pred_ref[:, pl.ds(col, tn)] = out

    return kernel


# ------------------------------ Parameter init ----------------------------- #

def _torch_linear_init(key, fan_in, fan_out):
    # PyTorch-style uniform(-1/sqrt(fan_in), 1/sqrt(fan_in)) init, deterministic.
    kw, kb = jax.random.split(key)
    bound = 1.0 / math.sqrt(fan_in)
    w = jax.random.uniform(kw, (fan_out, fan_in), jnp.float32, -bound, bound)
    b = jax.random.uniform(kb, (fan_out,), jnp.float32, -bound, bound)
    return w, b


def init_backbone_stub(key, in_channels, feature_dim):
    # TODO(synk): `base` is an external backbone (e.g. a ResNet) injected into
    # SiamMLP; modeled here as GAP + Linear in plain JAX, outside the kernel.
    w, b = _torch_linear_init(key, in_channels, feature_dim)
    return {"w": w, "b": b}


def backbone_features(backbone, x_img):
    # Global average pool runs in the XLA wrapper (per review: the pre-pool feature
    # map must not be DMA'd whole into VMEM), then the stand-in backbone head.
    pooled = jnp.mean(x_img.astype(jnp.float32), axis=(2, 3))        # (B, C)
    return pooled @ backbone["w"].T + backbone["b"]                   # (B, input_dim)


def init_siam_mlp_params(key, input_dim, out_dim, hidden_proj, hidden_pred):
    """Pack the five Linear (+BN) layers into lane-padded, pre-transposed slabs."""
    dims = [(input_dim, hidden_proj), (hidden_proj, hidden_proj),
            (hidden_proj, out_dim), (out_dim, hidden_pred), (hidden_pred, out_dim)]
    assert len(dims) == _NUM_LAYERS
    f_pad = _round_up(max(input_dim, out_dim, hidden_proj, hidden_pred), _LANE)

    w_all = jnp.zeros((_NUM_LAYERS, f_pad, f_pad), jnp.float32)
    b_all = jnp.zeros((_NUM_LAYERS, 1, f_pad), jnp.float32)
    g_all = jnp.zeros((_NUM_LAYERS, 1, f_pad), jnp.float32)
    t_all = jnp.zeros((_NUM_LAYERS, 1, f_pad), jnp.float32)

    raw = []
    for l, (fi, fo) in enumerate(dims):
        key, sub = jax.random.split(key)
        w, b = _torch_linear_init(sub, fi, fo)
        raw.append((w, b))
        w_all = w_all.at[l, :fi, :fo].set(w.T)        # pre-transposed to (in, out)
        if l in _BN_LAYERS:
            # Linear bias immediately before a training-mode BatchNorm1d is exactly
            # cancelled by the batch-mean subtraction -> dropped (bias row stays 0).
            g_all = g_all.at[l, 0, :fo].set(1.0)      # BN gamma = 1, beta = 0
        else:
            b_all = b_all.at[l, 0, :fo].set(b)

    params = {"w": w_all.astype(jnp.bfloat16),        # MXU operand, cast once at init
              "b": b_all, "gamma": g_all, "beta": t_all}
    return params, raw


# --------------------------------- Forward --------------------------------- #

def siam_mlp_forward(backbone, params, x_img, *, out_dim):
    """Mirrors SiamMLP.forward: returns (features, projections.detach(), predictions)."""
    features = backbone_features(backbone, x_img)                 # (B, input_dim) f32

    batch, input_dim = features.shape
    n_layers, f_pad, _ = params["w"].shape

    # Pad batch to >=16 rows (bf16 packs 16 sublanes per vreg -> full MXU rows);
    # padded rows are zero and are re-masked inside the kernel after every BN.
    b_pad = max(16, _round_up(batch, 16))
    feat_p = jnp.zeros((b_pad, f_pad), jnp.bfloat16)
    feat_p = feat_p.at[:batch, :input_dim].set(features.astype(jnp.bfloat16))

    # Weight tile width: 256 granules for v6e/v7x's 256x256 MXU when the padded
    # width allows it, else the 128-lane minimum (native width on v5e's MXU).
    tn = 256 if f_pad % 256 == 0 else _LANE
    grid = (n_layers, f_pad // tn)

    # VMEM budget: double-buffered streamed weight tiles + resident feats/outputs/
    # activation scratch, with headroom.  Clamped to 48 MiB (v7x: 64 MiB physical
    # per core); also lifts v5e's 16 MiB default scoped limit when widths grow.
    streamed = 2 * (f_pad * tn * 2 + 3 * tn * 4)
    resident = b_pad * f_pad * (2 + 2 * 2 + 2 * 4)
    vmem_limit = int(min(48 << 20, max(16 << 20, 2 * (streamed + resident))))

    cost = pl.CostEstimate(
        flops=2 * b_pad * f_pad * f_pad * n_layers + 12 * b_pad * f_pad * n_layers,
        transcendentals=len(_BN_LAYERS) * f_pad,
        bytes_accessed=(params["w"].size * 2 + 3 * n_layers * f_pad * 4
                        + b_pad * f_pad * 2 + 2 * b_pad * f_pad * 4),
    )

    proj_p, pred_p = pl.pallas_call(
        _make_siam_head_kernel(batch),
        out_shape=(jax.ShapeDtypeStruct((b_pad, f_pad), jnp.float32),
                   jax.ShapeDtypeStruct((b_pad, f_pad), jnp.float32)),
        grid=grid,
        in_specs=[
            # Backbone features: small, resident for the whole grid.
            pl.BlockSpec((b_pad, f_pad), lambda l, j: (0, 0)),
            # Streamed weight tiles: one (f_pad, tn) slab per grid step, double-
            # buffered by the BlockSpec pipeline (default Buffered(2)).
            pl.BlockSpec((1, f_pad, tn), lambda l, j: (l, 0, j)),
            pl.BlockSpec((1, 1, tn), lambda l, j: (l, 0, j)),     # bias
            pl.BlockSpec((1, 1, tn), lambda l, j: (l, 0, j)),     # BN gamma
            pl.BlockSpec((1, 1, tn), lambda l, j: (l, 0, j)),     # BN beta
        ],
        out_specs=(pl.BlockSpec((b_pad, f_pad), lambda l, j: (0, 0)),
                   pl.BlockSpec((b_pad, f_pad), lambda l, j: (0, 0))),
        scratch_shapes=[pltpu.VMEM((2, b_pad, f_pad), jnp.bfloat16)],
        compiler_params=pltpu.CompilerParams(
            dimension_semantics=("arbitrary", "arbitrary"),
            vmem_limit_bytes=vmem_limit,
        ),
        cost_estimate=cost,
    )(feat_p, params["w"], params["b"], params["gamma"], params["beta"])

    # Slice the lane/row-padded slabs back to the true sizes.
    projections = proj_p[:batch, :out_dim]
    predictions = pred_p[:batch, :out_dim]

    # projections.detach() -> stop_gradient (forward values identical).
    return features, lax.stop_gradient(projections), predictions


# ------------------------------ Pure-JAX reference -------------------------- #

def siam_mlp_reference(backbone, raw, x_img):
    """f32 reference of the PyTorch module (training-mode BatchNorm, biases kept)."""
    feats = backbone_features(backbone, x_img)

    def bn_relu(h):
        m = jnp.mean(h, axis=0, keepdims=True)
        v = jnp.mean((h - m) ** 2, axis=0, keepdims=True)
        return jax.nn.relu((h - m) / jnp.sqrt(v + _BN_EPS))      # gamma=1, beta=0

    (w0, b0), (w1, b1), (w2, b2), (w3, b3), (w4, b4) = raw
    h = bn_relu(feats @ w0.T + b0)
    h = bn_relu(h @ w1.T + b1)
    proj = h @ w2.T + b2
    h = bn_relu(proj @ w3.T + b3)
    pred = h @ w4.T + b4
    return feats, proj, pred


# ----------------------------------- Main ----------------------------------- #

if __name__ == "__main__":
    # Small shapes consistent with the module.
    B, C, H, W = 8, 4, 16, 16
    input_dim, out_dim, hidden_proj, hidden_pred = 32, 16, 32, 16

    key = jax.random.PRNGKey(0)
    k_base, k_head, k_x = jax.random.split(key, 3)

    backbone = init_backbone_stub(k_base, C, input_dim)
    params, raw = init_siam_mlp_params(k_head, input_dim, out_dim,
                                       hidden_proj, hidden_pred)
    x = jax.random.normal(k_x, (B, C, H, W), jnp.float32)    # NCHW, like PyTorch

    fwd = jax.jit(functools.partial(siam_mlp_forward, out_dim=out_dim))
    features, projections, predictions = fwd(backbone, params, x)
    jax.block_until_ready((features, projections, predictions))

    assert features.shape == (B, input_dim)
    assert projections.shape == (B, out_dim)
    assert predictions.shape == (B, out_dim)
    assert bool(jnp.all(jnp.isfinite(features)))
    assert bool(jnp.all(jnp.isfinite(projections)))
    assert bool(jnp.all(jnp.isfinite(predictions)))

    # Cross-check against the f32 reference (kernel matmul operands are bf16,
    # so this is tolerance-checked, not bit-exact).
    ref_f, ref_p, ref_q = siam_mlp_reference(backbone, raw, x)
    for got, want in ((features, ref_f), (projections, ref_p), (predictions, ref_q)):
        assert float(jnp.max(jnp.abs(got - want))) < 1e-1

    print("KERNEL_OK")
</pallas_src>

<mosaic_0001>
module attributes {stable_mosaic.version = 11 : i64} {
  func.func @kernel(%arg0: i32, %arg1: i32, %arg2: memref<16x128xbf16, #tpu.memory_space<vmem>>, %arg3: memref<1x128x128xbf16, #tpu.memory_space<vmem>>, %arg4: memref<1x1x128xf32, #tpu.memory_space<vmem>>, %arg5: memref<1x1x128xf32, #tpu.memory_space<vmem>>, %arg6: memref<1x1x128xf32, #tpu.memory_space<vmem>>, %arg7: memref<16x128xf32, #tpu.memory_space<vmem>>, %arg8: memref<16x128xf32, #tpu.memory_space<vmem>>, %arg9: memref<2x16x128xbf16, #tpu.memory_space<vmem>>) attributes {dimension_semantics = [#tpu.dimension_semantics<arbitrary>, #tpu.dimension_semantics<arbitrary>], iteration_bounds = array<i64: 5, 1>, scalar_prefetch = 0 : i64, scratch_operands = 1 : i64, tpu.core_type = #tpu.core_type<tc>, window_params = [{pipeline_mode = #tpu.pipeline_mode<synchronous>, transform_indices = @transform_0, window_bounds = array<i64: 16, 128>}, {transform_indices = @transform_1, window_bounds = array<i64: 1, 128, 128>}, {transform_indices = @transform_2, window_bounds = array<i64: 1, 1, 128>}, {transform_indices = @transform_3, window_bounds = array<i64: 1, 1, 128>}, {transform_indices = @transform_4, window_bounds = array<i64: 1, 1, 128>}, {pipeline_mode = #tpu.pipeline_mode<synchronous>, transform_indices = @transform_5, window_bounds = array<i64: 16, 128>}, {pipeline_mode = #tpu.pipeline_mode<synchronous>, transform_indices = @transform_6, window_bounds = array<i64: 16, 128>}]} {
    %c128_i32 = arith.constant 128 : i32
    %0 = arith.muli %arg1, %c128_i32 : i32
    %1 = tpu.assume_multiple %0, 128 : i32
    %c0_i32 = arith.constant 0 : i32
    %2 = arith.cmpi eq, %arg0, %c0_i32 : i32
    %c0_i32_0 = arith.constant 0 : i32
    %3 = arith.cmpi eq, %arg1, %c0_i32_0 : i32
    %4 = arith.andi %2, %3 : i1
    %5 = arith.extui %4 : i1 to i32
    %c0_i32_1 = arith.constant 0 : i32
    %6 = arith.cmpi ne, %5, %c0_i32_1 : i32
    scf.if %6 {
      %c0_36 = arith.constant 0 : index
      %c0_37 = arith.constant 0 : index
      %80 = vector.load %arg2[%c0_36, %c0_37] : memref<16x128xbf16, #tpu.memory_space<vmem>>, vector<16x128xbf16>
      %c0_38 = arith.constant 0 : index
      %c0_39 = arith.constant 0 : index
      %c0_40 = arith.constant 0 : index
      %81 = vector.load %arg9[%c0_38, %c0_39, %c0_40] : memref<2x16x128xbf16, #tpu.memory_space<vmem>>, vector<1x16x128xbf16>
      %82 = vector.shape_cast %81 : vector<1x16x128xbf16> to vector<16x128xbf16>
      %83 = vector.shape_cast %80 : vector<16x128xbf16> to vector<1x16x128xbf16>
      tpu.vector_store %arg9[%c0_38, %c0_39, %c0_40], %83 {strides = array<i32>} : memref<2x16x128xbf16, #tpu.memory_space<vmem>>, vector<1x16x128xbf16>,
    } else {
    }
    %c2_i32 = arith.constant 2 : i32
    %c0_i32_2 = arith.constant 0 : i32
    %7 = arith.cmpi eq, %c2_i32, %c0_i32_2 : i32
    %c1_i32 = arith.constant 1 : i32
    %8 = arith.select %7, %c1_i32, %c2_i32 : i32
    %9 = arith.remsi %arg0, %8 : i32
    %c0_i32_3 = arith.constant 0 : i32
    %10 = arith.cmpi ne, %9, %c0_i32_3 : i32
    %c0_i32_4 = arith.constant 0 : i32
    %11 = arith.cmpi slt, %9, %c0_i32_4 : i32
    %c0_i32_5 = arith.constant 0 : i32
    %12 = arith.cmpi slt, %8, %c0_i32_5 : i32
    %13 = arith.xori %11, %12 : i1
    %14 = arith.andi %13, %10 : i1
    %15 = arith.addi %9, %8 : i32
    %16 = arith.select %14, %15, %9 : i32
    %17 = arith.index_cast %16 : i32 to index
    %c0 = arith.constant 0 : index
    %c0_6 = arith.constant 0 : index
    %18 = vector.load %arg9[%17, %c0, %c0_6] : memref<2x16x128xbf16, #tpu.memory_space<vmem>>, vector<1x16x128xbf16>
    %19 = vector.shape_cast %18 : vector<1x16x128xbf16> to vector<16x128xbf16>
    %c0_7 = arith.constant 0 : index
    %c0_8 = arith.constant 0 : index
    %c0_9 = arith.constant 0 : index
    %20 = vector.load %arg3[%c0_7, %c0_8, %c0_9] : memref<1x128x128xbf16, #tpu.memory_space<vmem>>, vector<1x128x128xbf16>
    %21 = vector.shape_cast %20 : vector<1x128x128xbf16> to vector<128x128xbf16>
    %cst = arith.constant dense<0.000000e+00> : vector<16x128xf32>
    %22 = tpu.matmul %19, %21, %cst {dimension_numbers = #tpu.dot_dimension_numbers<[1], [0], [0], [1], [0, 0, 1, 1], [], []>} : vector<16x128xbf16>, vector<128x128xbf16>, vector<16x128xf32> -> vector<16x128xf32>
    %c0_10 = arith.constant 0 : index
    %c0_11 = arith.constant 0 : index
    %c0_12 = arith.constant 0 : index
    %23 = vector.load %arg4[%c0_10, %c0_11, %c0_12] : memref<1x1x128xf32, #tpu.memory_space<vmem>>, vector<1x1x128xf32>
    %24 = vector.shape_cast %23 : vector<1x1x128xf32> to vector<1x128xf32>
    %25 = vector.broadcast %24 : vector<1x128xf32> to vector<16x128xf32>
    %26 = arith.addf %22, %25 : vector<16x128xf32>
    %cst_13 = arith.constant dense<0.000000e+00> : vector<128xf32>
    %27 = vector.multi_reduction <add>, %26, %cst_13 [0] : vector<16x128xf32> to vector<128xf32>
    %28 = vector.shape_cast %27 : vector<128xf32> to vector<1x128xf32>
    %cst_14 = arith.constant 1.250000e-01 : f32
    %29 = vector.broadcast %cst_14 : f32 to vector<1x128xf32>
    %30 = arith.mulf %28, %29 : vector<1x128xf32>
    %31 = arith.mulf %26, %26 : vector<16x128xf32>
    %cst_15 = arith.constant dense<0.000000e+00> : vector<128xf32>
    %32 = vector.multi_reduction <add>, %31, %cst_15 [0] : vector<16x128xf32> to vector<128xf32>
    %33 = vector.shape_cast %32 : vector<128xf32> to vector<1x128xf32>
    %cst_16 = arith.constant 1.250000e-01 : f32
    %34 = vector.broadcast %cst_16 : f32 to vector<1x128xf32>
    %35 = arith.mulf %33, %34 : vector<1x128xf32>
    %36 = arith.mulf %30, %30 : vector<1x128xf32>
    %37 = arith.subf %35, %36 : vector<1x128xf32>
    %cst_17 = arith.constant 0.000000e+00 : f32
    %38 = vector.broadcast %cst_17 : f32 to vector<1x128xf32>
    %39 = arith.maximumf %37, %38 : vector<1x128xf32>
    %40 = vector.broadcast %30 : vector<1x128xf32> to vector<16x128xf32>
    %41 = arith.subf %26, %40 : vector<16x128xf32>
    %cst_18 = arith.constant 9.99999974E-6 : f32
    %42 = vector.broadcast %cst_18 : f32 to vector<1x128xf32>
    %43 = arith.addf %39, %42 : vector<1x128xf32>
    %44 = math.rsqrt %43 : vector<1x128xf32>
    %c0_19 = arith.constant 0 : index
    %c0_20 = arith.constant 0 : index
    %c0_21 = arith.constant 0 : index
    %45 = vector.load %arg5[%c0_19, %c0_20, %c0_21] : memref<1x1x128xf32, #tpu.memory_space<vmem>>, vector<1x1x128xf32>
    %46 = vector.shape_cast %45 : vector<1x1x128xf32> to vector<1x128xf32>
    %47 = arith.mulf %44, %46 : vector<1x128xf32>
    %48 = vector.broadcast %47 : vector<1x128xf32> to vector<16x128xf32>
    %49 = arith.mulf %41, %48 : vector<16x128xf32>
    %c0_22 = arith.constant 0 : index
    %c0_23 = arith.constant 0 : index
    %c0_24 = arith.constant 0 : index
    %50 = vector.load %arg6[%c0_22, %c0_23, %c0_24] : memref<1x1x128xf32, #tpu.memory_space<vmem>>, vector<1x1x128xf32>
    %51 = vector.shape_cast %50 : vector<1x1x128xf32> to vector<1x128xf32>
    %52 = vector.broadcast %51 : vector<1x128xf32> to vector<16x128xf32>
    %53 = arith.addf %49, %52 : vector<16x128xf32>
    %cst_25 = arith.constant 0.000000e+00 : f32
    %54 = vector.broadcast %cst_25 : f32 to vector<16x128xf32>
    %55 = arith.maximumf %53, %54 : vector<16x128xf32>
    %c0_i32_26 = arith.constant 0 : i32
    %56 = arith.cmpi eq, %arg0, %c0_i32_26 : i32
    %c1_i32_27 = arith.constant 1 : i32
    %57 = arith.cmpi eq, %arg0, %c1_i32_27 : i32
    %58 = arith.ori %56, %57 : i1
    %c3_i32 = arith.constant 3 : i32
    %59 = arith.cmpi eq, %arg0, %c3_i32 : i32
    %60 = arith.ori %58, %59 : i1
    %61 = tpu.iota {dimensions = array<i32: 0>} : vector<16x128xi32>
    %62 = arith.select %60, %55, %26 : vector<16x128xf32>
    %c8_i32 = arith.constant 8 : i32
    %63 = vector.broadcast %c8_i32 : i32 to vector<16x128xi32>
    %64 = arith.cmpi slt, %61, %63 : vector<16x128xi32>
    %cst_28 = arith.constant 0.000000e+00 : f32
    %65 = vector.broadcast %cst_28 : f32 to vector<16x128xf32>
    %66 = arith.select %64, %62, %65 : vector<16x128xi1>, vector<16x128xf32>
    %67 = arith.truncf %66 : vector<16x128xf32> to vector<16x128xbf16>
    %c0_i32_29 = arith.constant 0 : i32
    %68 = arith.cmpi eq, %16, %c0_i32_29 : i32
    %69 = arith.extui %68 : i1 to i32
    %c0_i32_30 = arith.constant 0 : i32
    %70 = arith.cmpi ne, %69, %c0_i32_30 : i32
    scf.if %70 {
      %c1 = arith.constant 1 : index
      %c0_36 = arith.constant 0 : index
      %80 = arith.index_cast %1 : i32 to index
      %81 = vector.load %arg9[%c1, %c0_36, %80] : memref<2x16x128xbf16, #tpu.memory_space<vmem>>, vector<1x16x128xbf16>
      %82 = vector.shape_cast %81 : vector<1x16x128xbf16> to vector<16x128xbf16>
      %83 = vector.shape_cast %67 : vector<16x128xbf16> to vector<1x16x128xbf16>
      tpu.vector_store %arg9[%c1, %c0_36, %80], %83 {strides = array<i32>} : memref<2x16x128xbf16, #tpu.memory_space<vmem>>, vector<1x16x128xbf16>,
    } else {
    }
    %c1_i32_31 = arith.constant 1 : i32
    %71 = arith.cmpi eq, %16, %c1_i32_31 : i32
    %72 = arith.extui %71 : i1 to i32
    %c0_i32_32 = arith.constant 0 : i32
    %73 = arith.cmpi ne, %72, %c0_i32_32 : i32
    scf.if %73 {
      %c0_36 = arith.constant 0 : index
      %c0_37 = arith.constant 0 : index
      %80 = arith.index_cast %1 : i32 to index
      %81 = vector.load %arg9[%c0_36, %c0_37, %80] : memref<2x16x128xbf16, #tpu.memory_space<vmem>>, vector<1x16x128xbf16>
      %82 = vector.shape_cast %81 : vector<1x16x128xbf16> to vector<16x128xbf16>
      %83 = vector.shape_cast %67 : vector<16x128xbf16> to vector<1x16x128xbf16>
      tpu.vector_store %arg9[%c0_36, %c0_37, %80], %83 {strides = array<i32>} : memref<2x16x128xbf16, #tpu.memory_space<vmem>>, vector<1x16x128xbf16>,
    } else {
    }
    %c2_i32_33 = arith.constant 2 : i32
    %74 = arith.cmpi eq, %arg0, %c2_i32_33 : i32
    %75 = arith.extui %74 : i1 to i32
    %c0_i32_34 = arith.constant 0 : i32
    %76 = arith.cmpi ne, %75, %c0_i32_34 : i32
    scf.if %76 {
      %c0_36 = arith.constant 0 : index
      %80 = arith.index_cast %1 : i32 to index
      %81 = vector.load %arg7[%c0_36, %80] : memref<16x128xf32, #tpu.memory_space<vmem>>, vector<16x128xf32>
      tpu.vector_store %arg7[%c0_36, %80], %66 {strides = array<i32>} : memref<16x128xf32, #tpu.memory_space<vmem>>, vector<16x128xf32>,
    } else {
    }
    %c4_i32 = arith.constant 4 : i32
    %77 = arith.cmpi eq, %arg0, %c4_i32 : i32
    %78 = arith.extui %77 : i1 to i32
    %c0_i32_35 = arith.constant 0 : i32
    %79 = arith.cmpi ne, %78, %c0_i32_35 : i32
    scf.if %79 {
      %c0_36 = arith.constant 0 : index
      %80 = arith.index_cast %1 : i32 to index
      %81 = vector.load %arg8[%c0_36, %80] : memref<16x128xf32, #tpu.memory_space<vmem>>, vector<16x128xf32>
      tpu.vector_store %arg8[%c0_36, %80], %66 {strides = array<i32>} : memref<16x128xf32, #tpu.memory_space<vmem>>, vector<16x128xf32>,
    } else {
    }
    return
  }
  func.func @transform_0(%arg0: i32, %arg1: i32) -> (i32, i32) {
    %c0_i32 = arith.constant 0 : i32
    %c0_i32_0 = arith.constant 0 : i32
    %c0_i32_1 = arith.constant 0 : i32
    return %c0_i32, %c0_i32_0 : i32, i32
  }
  func.func @transform_1(%arg0: i32, %arg1: i32) -> (i32, i32, i32) {
    %c0_i32 = arith.constant 0 : i32
    %c0_i32_0 = arith.constant 0 : i32
    return %arg0, %c0_i32, %arg1 : i32, i32, i32
  }
  func.func @transform_2(%arg0: i32, %arg1: i32) -> (i32, i32, i32) {
    %c0_i32 = arith.constant 0 : i32
    %c0_i32_0 = arith.constant 0 : i32
    return %arg0, %c0_i32, %arg1 : i32, i32, i32
  }
  func.func @transform_3(%arg0: i32, %arg1: i32) -> (i32, i32, i32) {
    %c0_i32 = arith.constant 0 : i32
    %c0_i32_0 = arith.constant 0 : i32
    return %arg0, %c0_i32, %arg1 : i32, i32, i32
  }
  func.func @transform_4(%arg0: i32, %arg1: i32) -> (i32, i32, i32) {
    %c0_i32 = arith.constant 0 : i32
    %c0_i32_0 = arith.constant 0 : i32
    return %arg0, %c0_i32, %arg1 : i32, i32, i32
  }
  func.func @transform_5(%arg0: i32, %arg1: i32) -> (i32, i32) {
    %c0_i32 = arith.constant 0 : i32
    %c0_i32_0 = arith.constant 0 : i32
    %c0_i32_1 = arith.constant 0 : i32
    return %c0_i32, %c0_i32_0 : i32, i32
  }
  func.func @transform_6(%arg0: i32, %arg1: i32) -> (i32, i32) {
    %c0_i32 = arith.constant 0 : i32
    %c0_i32_0 = arith.constant 0 : i32
    %c0_i32_1 = arith.constant 0 : i32
    return %c0_i32, %c0_i32_0 : i32, i32
  }
}

</mosaic_0001>

<llo_original>
// kernel: siam_mlp_forward.1
$region0: #{siam_mlp_forward.1}
  #allocation0 [shape = 'u32[]', space=smem, size = 0x4, offset = 0x4, fixed_abs, tag = 'smem constant byte address 0x4 - core index']
  #allocation1 [shape = 'u32[144,128]{1,0:T(1,128)}', space=vmem, size = 0x12000, scoped, tag = 'internal scratch']
  #allocation2 [shape = 'bf16[2,16,128]{2,1,0:T(8,128)(2,1)}', space=vmem, size = 0x2000, scoped, tag = 'scratch operand']
  %s0 = inlined_call_operand.vmem [shape: bf16[16,128], index: 0, kind: input, shape index: {}]
  %s1 = inlined_call_operand.vmem [shape: bf16[5,128,128], index: 1, kind: input, shape index: {}]
  %s2 = inlined_call_operand.vmem [shape: f32[5,1,128], index: 2, kind: input, shape index: {}]
  %s3 = inlined_call_operand.vmem [shape: f32[5,1,128], index: 3, kind: input, shape index: {}]
  %s4 = inlined_call_operand.vmem [shape: f32[5,1,128], index: 4, kind: input, shape index: {}]
  %s5 = inlined_call_operand.vmem [shape: f32[16,128], index: 5, kind: output, shape index: {0}]
  %s6 = inlined_call_operand.vmem [shape: f32[16,128], index: 6, kind: output, shape index: {1}]
  %7 = xla_tuple %s5, %s6
  %s8 = sld [smem:[#allocation0]]
  $region81: #{siam_mlp_forward.1} parent=0
    _
  %s10 = ssub.s32 1, %s8
  %s11 = scalar_select 0, %s10, %s8
  loop: start=0, step=1, limit=7
  $region2: #{siam_mlp_forward.1} parent=0 // loop_pre_header
    _
  $region3: #{siam_mlp_forward.1} parent=0 // loop_header
    %s13 = sphi 0, %s17
    %p14 = scmp.ge.s32.totalorder %s13, 7
    %s20 = sphi 0, %s32
    %s21 = sphi 0, %s28
    %s22 = sphi 0, %s20
    %s23 = sphi 0, %s21
    %s24 = sphi 0, %s22
    %s25 = sphi 0, %s23
    %s33 = sphi 0, %s33
    %s35 = sphi 0, %s33
    %s36 = sphi 0, %s35
    %s50 = sphi 0, %s36
    %s58 = sphi 0, %s60
    %s61 = sphi 0, %s58
    %s62 = sphi 0, %s61
    %s78 = sphi 0, %s62
    %s86 = sphi 0, %s88
    %s89 = sphi 0, %s86
    %s90 = sphi 0, %s89
    %s106 = sphi 0, %s90
    %s114 = sphi 0, %s116
    %s117 = sphi 0, %s114
    %s118 = sphi 0, %s117
    %s134 = sphi 0, %s118
    %s142 = sphi 0, %s144
    %s145 = sphi 0, %s142
    %s146 = sphi 0, %s145
    %s162 = sphi 0, %s146
    %s166 = sphi 0, %s166
    %s168 = sphi 0, %s166
    %s169 = sphi 0, %s168
    %s183 = sphi 0, %s169
    %s187 = sphi 0, %s187
    %s189 = sphi 0, %s187
    %s190 = sphi 0, %s189
    %s204 = sphi 0, %s190
  $region4: #{siam_mlp_forward.1} parent=0 // loop_header_branch
    %16 = sbr.rel (%p14) target = $region8
  $region5: #{siam_mlp_forward.1} parent=0 // loop_body
    %s18 = ssub.s32 %s13, 1
    %s19 = ssub.s32 %s13, 2
    %s26 = sadd.s32 1, %s21
    %p27 = scmp.ge.s32.totalorder %s26, 1
    %s28 = scalar_select %p27, 0, %s26
    %s29 = sadd.s32 1, %s20
    %s30 = scalar_select %p27, %s29, %s20
    %p31 = scmp.ge.s32.totalorder %s30, 5
    %s32 = scalar_select %p31, 0, %s30
    %s34 = sadd.s32 %s33, 1
    %p37 = scmp.eq.s32.totalorder %s13, 4
    %p38 = scmp.ne.s32.totalorder %s33, %s35
    %p39 = scmp.eq.s32.totalorder %s13, 0
    %p40 = por %p38, %p39
    %p41 = scmp.ne.s32.totalorder %s33, %s35
    %p42 = scmp.eq.s32.totalorder %s18, 4
    %p43 = por %p41, %p42
    %p44 = scmp.ne.s32.totalorder %s35, %s36
    %p45 = scmp.eq.s32.totalorder %s18, 0
    %p46 = por %p44, %p45
    %p47 = scmp.ne.s32.totalorder %s35, %s36
    %p48 = scmp.eq.s32.totalorder %s19, 4
    %p49 = por %p47, %p48
    %p51 = scmp.ne.s32.totalorder %s36, %s50
    %p52 = scmp.eq.s32.totalorder %s19, 0
    %p53 = por %p51, %p52
    %s54 = ssub.s32 %s20, %s32
    %s55 = ssub.s32 %s21, %s28
    %s56 = sor.u32 %s54, %s55
    %p57 = scmp.eq.s32.totalorder %s56, 0
    %s59 = sadd.s32 %s58, 1
    %s60 = scalar_select %p57, %s58, %s59
    %p63 = pneg %p57
    %p64 = scmp.eq.s32.totalorder %s13, 4
    %p65 = por %p63, %p64
    %p66 = scmp.ne.s32.totalorder %s58, %s61
    %p67 = scmp.eq.s32.totalorder %s13, 0
    %p68 = por %p66, %p67
    %p69 = scmp.ne.s32.totalorder %s58, %s61
    %p70 = scmp.eq.s32.totalorder %s18, 4
    %p71 = por %p69, %p70
    %p72 = scmp.ne.s32.totalorder %s61, %s62
    %p73 = scmp.eq.s32.totalorder %s18, 0
    %p74 = por %p72, %p73
    %p75 = scmp.ne.s32.totalorder %s61, %s62
    %p76 = scmp.eq.s32.totalorder %s19, 4
    %p77 = por %p75, %p76
    %p79 = scmp.ne.s32.totalorder %s62, %s78
    %p80 = scmp.eq.s32.totalorder %s19, 0
    %p81 = por %p79, %p80
    %s82 = ssub.s32 %s20, %s32
    %s83 = ssub.s32 %s21, %s28
    %s84 = sor.u32 %s82, %s83
    %p85 = scmp.eq.s32.totalorder %s84, 0
    %s87 = sadd.s32 %s86, 1
    %s88 = scalar_select %p85, %s86, %s87
    %p91 = pneg %p85
    %p92 = scmp.eq.s32.totalorder %s13, 4
    %p93 = por %p91, %p92
    %p94 = scmp.ne.s32.totalorder %s86, %s89
    %p95 = scmp.eq.s32.totalorder %s13, 0
    %p96 = por %p94, %p95
    %p97 = scmp.ne.s32.totalorder %s86, %s89
    %p98 = scmp.eq.s32.totalorder %s18, 4
    %p99 = por %p97, %p98
    %p100 = scmp.ne.s32.totalorder %s89, %s90
    %p101 = scmp.eq.s32.totalorder %s18, 0
    %p102 = por %p100, %p101
    %p103 = scmp.ne.s32.totalorder %s89, %s90
    %p104 = scmp.eq.s32.totalorder %s19, 4
    %p105 = por %p103, %p104
    %p107 = scmp.ne.s32.totalorder %s90, %s106
    %p108 = scmp.eq.s32.totalorder %s19, 0
    %p109 = por %p107, %p108
    %s110 = ssub.s32 %s20, %s32
    %s111 = ssub.s32 %s21, %s28
    %s112 = sor.u32 %s110, %s111
    %p113 = scmp.eq.s32.totalorder %s112, 0
    %s115 = sadd.s32 %s114, 1
    %s116 = scalar_select %p113, %s114, %s115
    %p119 = pneg %p113
    %p120 = scmp.eq.s32.totalorder %s13, 4
    %p121 = por %p119, %p120
    %p122 = scmp.ne.s32.totalorder %s114, %s117
    %p123 = scmp.eq.s32.totalorder %s13, 0
    %p124 = por %p122, %p123
    %p125 = scmp.ne.s32.totalorder %s114, %s117
    %p126 = scmp.eq.s32.totalorder %s18, 4
    %p127 = por %p125, %p126
    %p128 = scmp.ne.s32.totalorder %s117, %s118
    %p129 = scmp.eq.s32.totalorder %s18, 0
    %p130 = por %p128, %p129
    %p131 = scmp.ne.s32.totalorder %s117, %s118
    %p132 = scmp.eq.s32.totalorder %s19, 4
    %p133 = por %p131, %p132
    %p135 = scmp.ne.s32.totalorder %s118, %s134
    %p136 = scmp.eq.s32.totalorder %s19, 0
    %p137 = por %p135, %p136
    %s138 = ssub.s32 %s20, %s32
    %s139 = ssub.s32 %s21, %s28
    %s140 = sor.u32 %s138, %s139
    %p141 = scmp.eq.s32.totalorder %s140, 0
    %s143 = sadd.s32 %s142, 1
    %s144 = scalar_select %p141, %s142, %s143
    %p147 = pneg %p141
    %p148 = scmp.eq.s32.totalorder %s13, 4
    %p149 = por %p147, %p148
    %p150 = scmp.ne.s32.totalorder %s142, %s145
    %p151 = scmp.eq.s32.totalorder %s13, 0
    %p152 = por %p150, %p151
    %p153 = scmp.ne.s32.totalorder %s142, %s145
    %p154 = scmp.eq.s32.totalorder %s18, 4
    %p155 = por %p153, %p154
    %p156 = scmp.ne.s32.totalorder %s145, %s146
    %p157 = scmp.eq.s32.totalorder %s18, 0
    %p158 = por %p156, %p157
    %p159 = scmp.ne.s32.totalorder %s145, %s146
    %p160 = scmp.eq.s32.totalorder %s19, 4
    %p161 = por %p159, %p160
    %p163 = scmp.ne.s32.totalorder %s146, %s162
    %p164 = scmp.eq.s32.totalorder %s19, 0
    %p165 = por %p163, %p164
    %s167 = sadd.s32 %s166, 1
    %p170 = scmp.eq.s32.totalorder %s13, 4
    %p171 = scmp.ne.s32.totalorder %s166, %s168
    %p172 = scmp.eq.s32.totalorder %s13, 0
    %p173 = por %p171, %p172
    %p174 = scmp.ne.s32.totalorder %s166, %s168
    %p175 = scmp.eq.s32.totalorder %s18, 4
    %p176 = por %p174, %p175
    %p177 = scmp.ne.s32.totalorder %s168, %s169
    %p178 = scmp.eq.s32.totalorder %s18, 0
    %p179 = por %p177, %p178
    %p180 = scmp.ne.s32.totalorder %s168, %s169
    %p181 = scmp.eq.s32.totalorder %s19, 4
    %p182 = por %p180, %p181
    %p184 = scmp.ne.s32.totalorder %s169, %s183
    %p185 = scmp.eq.s32.totalorder %s19, 0
    %p186 = por %p184, %p185
    %s188 = sadd.s32 %s187, 1
    %p191 = scmp.eq.s32.totalorder %s13, 4
    %p192 = scmp.ne.s32.totalorder %s187, %s189
    %p193 = scmp.eq.s32.totalorder %s13, 0
    %p194 = por %p192, %p193
    %p195 = scmp.ne.s32.totalorder %s187, %s189
    %p196 = scmp.eq.s32.totalorder %s18, 4
    %p197 = por %p195, %p196
    %p198 = scmp.ne.s32.totalorder %s189, %s190
    %p199 = scmp.eq.s32.totalorder %s18, 0
    %p200 = por %p198, %p199
    %p201 = scmp.ne.s32.totalorder %s189, %s190
    %p202 = scmp.eq.s32.totalorder %s19, 4
    %p203 = por %p201, %p202
    %p205 = scmp.ne.s32.totalorder %s190, %s204
    %p206 = scmp.eq.s32.totalorder %s19, 0
    %p207 = por %p205, %p206
    %p208 = scmp.le.s32.totalorder 1, %s13
    %p209 = scmp.lt.s32.totalorder %s13, 6
    %p210 = pnand %p208, %p209
    %p211 = pneg %p210
    // Predicated region
    $region9: #{siam_mlp_forward.1} parent=5 // pred_check
      _
    $region10: #{siam_mlp_forward.1} parent=5 // pred_check_branch
      %213 = sbr.rel (%p210) target = $region12
    $region11: #{siam_mlp_forward.1} parent=5 // pred_region
      %s214 = ssub.s32 %s13, 1
      // Predicated region
      $region13: #{siam_mlp_forward.1} parent=11 // pred_check
        %p215 = pneg %p46
      $region14: #{siam_mlp_forward.1} parent=11 // pred_check_branch
        %217 = sbr.rel (%p215) target = $region16
      $region15: #{siam_mlp_forward.1} parent=11 // pred_region
        _
      $region16: #{siam_mlp_forward.1} parent=11 // pred_fallthru
        _
    $region12: #{siam_mlp_forward.1} parent=5 // pred_fallthru
      _
    %p218 = scmp.lt.s32.totalorder %s13, 5
    // Predicated region
    $region17: #{siam_mlp_forward.1} parent=5 // pred_check
      %p219 = pneg %p218
    $region18: #{siam_mlp_forward.1} parent=5 // pred_check_branch
      %221 = sbr.rel (%p219) target = $region20
    $region19: #{siam_mlp_forward.1} parent=5 // pred_region
      // Predicated region
      $region21: #{siam_mlp_forward.1} parent=19 // pred_check
        %p222 = pneg %p68
      $region22: #{siam_mlp_forward.1} parent=19 // pred_check_branch
        %224 = sbr.rel (%p222) target = $region24
      $region23: #{siam_mlp_forward.1} parent=19 // pred_region
        %p225 = scmp.lt.s32.totalorder %s20, 4
        %s226 = scalar_select %p225, %s20, 4
        %p227 = scmp.lt.s32.totalorder %s21, 0
        %s228 = scalar_select %p227, %s21, 0
        %s229 = smul.addr %s226, 16
        %s230 = sadd.s32 %s228, %s229
        %s231 = smul.addr %s230, 4
        %s232 = scalar_lea.vmem %s1, %s231
      $region24: #{siam_mlp_forward.1} parent=19 // pred_fallthru
        _
      // Predicated region
      $region25: #{siam_mlp_forward.1} parent=19 // pred_check
        %p233 = pneg %p96
      $region26: #{siam_mlp_forward.1} parent=19 // pred_check_branch
        %235 = sbr.rel (%p233) target = $region28
      $region27: #{siam_mlp_forward.1} parent=19 // pred_region
        %p236 = scmp.lt.s32.totalorder %s20, 4
        %s237 = scalar_select %p236, %s20, 4
        %p238 = scmp.lt.s32.totalorder %s21, 0
        %s239 = scalar_select %p238, %s21, 0
        %s240 = sadd.s32 %s239, %s237
        %s241 = scalar_lea.vmem %s2, %s240
      $region28: #{siam_mlp_forward.1} parent=19 // pred_fallthru
        _
      // Predicated region
      $region29: #{siam_mlp_forward.1} parent=19 // pred_check
        %p242 = pneg %p124
      $region30: #{siam_mlp_forward.1} parent=19 // pred_check_branch
        %244 = sbr.rel (%p242) target = $region32
      $region31: #{siam_mlp_forward.1} parent=19 // pred_region
        %p245 = scmp.lt.s32.totalorder %s20, 4
        %s246 = scalar_select %p245, %s20, 4
        %p247 = scmp.lt.s32.totalorder %s21, 0
        %s248 = scalar_select %p247, %s21, 0
        %s249 = sadd.s32 %s248, %s246
        %s250 = scalar_lea.vmem %s3, %s249
      $region32: #{siam_mlp_forward.1} parent=19 // pred_fallthru
        _
      // Predicated region
      $region33: #{siam_mlp_forward.1} parent=19 // pred_check
        %p251 = pneg %p152
      $region34: #{siam_mlp_forward.1} parent=19 // pred_check_branch
        %253 = sbr.rel (%p251) target = $region36
      $region35: #{siam_mlp_forward.1} parent=19 // pred_region
        %p254 = scmp.lt.s32.totalorder %s20, 4
        %s255 = scalar_select %p254, %s20, 4
        %p256 = scmp.lt.s32.totalorder %s21, 0
        %s257 = scalar_select %p256, %s21, 0
        %s258 = sadd.s32 %s257, %s255
        %s259 = scalar_lea.vmem %s4, %s258
      $region36: #{siam_mlp_forward.1} parent=19 // pred_fallthru
        _
    $region20: #{siam_mlp_forward.1} parent=5 // pred_fallthru
      _
    %p260 = scmp.le.s32.totalorder 1, %s13
    %p261 = scmp.lt.s32.totalorder %s13, 6
    %p262 = pnand %p260, %p261
    %p263 = pneg %p262
    // Predicated region
    $region37: #{siam_mlp_forward.1} parent=5 // pred_check
      _
    $region38: #{siam_mlp_forward.1} parent=5 // pred_check_branch
      %265 = sbr.rel (%p262) target = $region40
    $region39: #{siam_mlp_forward.1} parent=5 // pred_region
      %s266 = ssub.s32 %s13, 1
      %p267 = pneg %p46
      %p268 = pneg %p43
      %p269 = scmp.lt.s32.totalorder %s22, 4
      %s270 = scalar_select %p269, %s22, 4
      %p271 = scmp.lt.s32.totalorder %s23, 0
      %s272 = scalar_select %p271, %s23, 0
      %s273 = smul.addr %s270, 16
      %s274 = sadd.s32 %s272, %s273
      %s275 = smul.addr %s274, 4
      %s276 = scalar_lea.vmem %s1, %s275
      %p277 = pneg %p74
      %p278 = pneg %p71
      %p279 = scmp.lt.s32.totalorder %s22, 4
      %s280 = scalar_select %p279, %s22, 4
      %p281 = scmp.lt.s32.totalorder %s23, 0
      %s282 = scalar_select %p281, %s23, 0
      %s283 = sadd.s32 %s282, %s280
      %s284 = scalar_lea.vmem %s2, %s283
      %p285 = pneg %p102
      %p286 = pneg %p99
      %p287 = scmp.lt.s32.totalorder %s22, 4
      %s288 = scalar_select %p287, %s22, 4
      %p289 = scmp.lt.s32.totalorder %s23, 0
      %s290 = scalar_select %p289, %s23, 0
      %s291 = sadd.s32 %s290, %s288
      %s292 = scalar_lea.vmem %s3, %s291
      %p293 = pneg %p130
      %p294 = pneg %p127
      %p295 = scmp.lt.s32.totalorder %s22, 4
      %s296 = scalar_select %p295, %s22, 4
      %p297 = scmp.lt.s32.totalorder %s23, 0
      %s298 = scalar_select %p297, %s23, 0
      %s299 = sadd.s32 %s298, %s296
      %s300 = scalar_lea.vmem %s4, %s299
      %p301 = pneg %p158
      %p302 = pneg %p155
      %p303 = pneg %p179
      %p304 = pneg %p176
      %p305 = pneg %p200
      %p306 = pneg %p197
      %p307 = scmp.lt.s32.totalorder %s22, 4
      %s308 = scalar_select %p307, %s22, 4
      %p309 = scmp.lt.s32.totalorder %s23, 0
      %s310 = scalar_select %p309, %s23, 0
      %s311 = smul.addr %s308, 16
      %s312 = sadd.s32 %s310, %s311
      %s313 = smul.addr %s312, 4
      %s314 = scalar_lea.vmem %s1, %s313
      %p315 = scmp.lt.s32.totalorder %s22, 4
      %s316 = scalar_select %p315, %s22, 4
      %p317 = scmp.lt.s32.totalorder %s23, 0
      %s318 = scalar_select %p317, %s23, 0
      %s319 = sadd.s32 %s318, %s316
      %s320 = scalar_lea.vmem %s2, %s319
      %p321 = scmp.lt.s32.totalorder %s22, 4
      %s322 = scalar_select %p321, %s22, 4
      %p323 = scmp.lt.s32.totalorder %s23, 0
      %s324 = scalar_select %p323, %s23, 0
      %s325 = sadd.s32 %s324, %s322
      %s326 = scalar_lea.vmem %s3, %s325
      %p327 = scmp.lt.s32.totalorder %s22, 4
      %s328 = scalar_select %p327, %s22, 4
      %p329 = scmp.lt.s32.totalorder %s23, 0
      %s330 = scalar_select %p329, %s23, 0
      %s331 = sadd.s32 %s330, %s328
      %s332 = scalar_lea.vmem %s4, %s331
      %s334 = smul.u32 %s23, 128
      %p335 = scmp.eq.s32.totalorder %s22, 0
      %p336 = scmp.eq.s32.totalorder %s23, 0
      %p337 = pnand %p335, %p336
      %p338 = pneg %p337
      // Predicated region
      $region41: #{siam_mlp_forward.1} parent=39 // pred_check
        _
      $region42: #{siam_mlp_forward.1} parent=39 // pred_check_branch
        %340 = sbr.rel (%p337) target = $region44
      $region43: #{siam_mlp_forward.1} parent=39 // pred_region
        %v341 = vld [vmem:[%s0] sm:$0xf]
        %v342 = vld [vmem:[%s0 + $0x4] sm:$0xf]
        %343 = vst [vmem:[#allocation2] sm:$0xf] %v341
        %344 = vst [vmem:[#allocation2 + $0x4] sm:$0xf] %v342
      $region44: #{siam_mlp_forward.1} parent=39 // pred_fallthru
        _
      %p345 = scmp.lt.s32.totalorder %s22, 0
      %s346 = ssub.s32 0, %s22
      %s347 = scalar_select %p345, %s346, %s22
      %s348 = sand.u32 %s347, 1
      %s349 = ssub.s32 0, %s348
      %s350 = scalar_select %p345, %s349, %s348
      %p351 = scmp.ne.s32.totalorder %s350, 0
      %p352 = scmp.lt.s32.totalorder %s350, 0
      %p353 = pnand %p352, %p351
      %p354 = pneg %p353
      %s355 = sadd.s32 %s350, 2
      %s356 = scalar_select %p354, %s355, %s350
      %s357 = smul.u32 %s356, 2
      %s358 = smul.addr %s357, 4
      %s359 = scalar_lea.vmem [#allocation2], %s358
      %v360 = vld [vmem:[%s359] sm:$0xf]
      %v361 = vld [vmem:[%s359 + $0x4] sm:$0xf]
      %v362 = vld [vmem:[%s314] sm:$0xf]
      %v363 = vld [vmem:[%s314 + $0x4] sm:$0xf]
      %v364 = vld [vmem:[%s314 + $0x8] sm:$0xf]
      %v365 = vld [vmem:[%s314 + $0xc] sm:$0xf]
      %v366 = vld [vmem:[%s314 + $0x10] sm:$0xf]
      %v367 = vld [vmem:[%s314 + $0x14] sm:$0xf]
      %v368 = vld [vmem:[%s314 + $0x18] sm:$0xf]
      %v369 = vld [vmem:[%s314 + $0x1c] sm:$0xf]
      %v370 = vld [vmem:[%s314 + $0x20] sm:$0xf]
      %v371 = vld [vmem:[%s314 + $0x24] sm:$0xf]
      %v372 = vld [vmem:[%s314 + $0x28] sm:$0xf]
      %v373 = vld [vmem:[%s314 + $0x2c] sm:$0xf]
      %v374 = vld [vmem:[%s314 + $0x30] sm:$0xf]
      %v375 = vld [vmem:[%s314 + $0x34] sm:$0xf]
      %v376 = vld [vmem:[%s314 + $0x38] sm:$0xf]
      %v377 = vld [vmem:[%s314 + $0x3c] sm:$0xf]
      %v378 = vld [vmem:[%s320] sm:$0x1]
      %v380 = vlaneseq
      %v381 = vshrl.u32 %v380, 7
      %v382 = vsub.s32 0, %v381
      %v383 = vrot.slane %v378, %v382
      %v387 = vunpack.c.l.b16 %v360
      %v388 = vunpack.c.l.b16 %v361
      %v389 = vpack.c.b16 %v388, %v387
      %v407 = vunpack.c.l.b16 %v362
      %v408 = vunpack.c.l.b16 %v363
      %v409 = vunpack.c.l.b16 %v364
      %v410 = vunpack.c.l.b16 %v365
      %v411 = vunpack.c.l.b16 %v366
      %v412 = vunpack.c.l.b16 %v367
      %v413 = vunpack.c.l.b16 %v368
      %v414 = vunpack.c.l.b16 %v369
      %v415 = vunpack.c.l.b16 %v370
      %v416 = vunpack.c.l.b16 %v371
      %v417 = vunpack.c.l.b16 %v372
      %v418 = vunpack.c.l.b16 %v373
      %v419 = vunpack.c.l.b16 %v374
      %v420 = vunpack.c.l.b16 %v375
      %v421 = vunpack.c.l.b16 %v376
      %v422 = vunpack.c.l.b16 %v377
      %v423 = vpack.c.b16 %v408, %v407
      %v424 = vpack.c.b16 %v410, %v409
      %v425 = vpack.c.b16 %v412, %v411
      %v426 = vpack.c.b16 %v414, %v413
      %v427 = vpack.c.b16 %v416, %v415
      %v428 = vpack.c.b16 %v418, %v417
      %v429 = vpack.c.b16 %v420, %v419
      %v430 = vpack.c.b16 %v422, %v421
      %439 = vmatprep.subr.bf16.mxu0 0
      %440 = vmatpush1.bf16.msra.mxu0 %v430
      %441 = vmatprep.subr.bf16.mxu0 0
      %442 = vmatpush1.bf16.msra.mxu0 %v429
      %443 = vmatprep.subr.bf16.mxu0 0
      %444 = vmatpush1.bf16.msra.mxu0 %v428
      %445 = vmatprep.subr.bf16.mxu0 0
      %446 = vmatpush1.bf16.msra.mxu0 %v427
      %447 = vmatprep.subr.bf16.mxu0 0
      %448 = vmatpush1.bf16.msra.mxu0 %v426
      %449 = vmatprep.subr.bf16.mxu0 0
      %450 = vmatpush1.bf16.msra.mxu0 %v425
      %451 = vmatprep.subr.bf16.mxu0 0
      %452 = vmatpush1.bf16.msra.mxu0 %v424
      %453 = vmatprep.subr.bf16.mxu0 0
      %454 = vmatpush1.bf16.msra.mxu0 %v423
      %455 = vmatprep.subr.bf16.mxu0 0
      %456 = vmatpush2.bf16.msra.mxu0 0
      %457 = vmatprep.subr.bf16.mxu0 0
      %458 = vmatpush2.bf16.msra.mxu0 0
      %459 = vmatprep.subr.bf16.mxu0 0
      %460 = vmatpush2.bf16.msra.mxu0 0
      %461 = vmatprep.subr.bf16.mxu0 0
      %462 = vmatpush2.bf16.msra.mxu0 0
      %463 = vmatprep.subr.bf16.mxu0 0
      %464 = vmatpush2.bf16.msra.mxu0 0
      %465 = vmatprep.subr.bf16.mxu0 0
      %466 = vmatpush2.bf16.msra.mxu0 0
      %467 = vmatprep.subr.bf16.mxu0 0
      %468 = vmatpush2.bf16.msra.mxu0 0
      %469 = vmatprep.subr.bf16.mxu0 0
      %470 = vmatpush2.bf16.msra.mxu0 0
      %471 = vmatprep.mubr.bf16.mxu0 0
      %472 = vmatmul.mubr.bf16.gmra.mxu0 %v389
      %v473 = vpop.f32.mrf.mxu0
      %v474 = vadd.f32 %v383, %v473
      %v475 = vpop.f32.mrf.mxu0
      %v476 = vpop.f32.mrf.mxu0
      %v477 = vadd.f32 %v383, %v476
      %v478 = vpop.f32.mrf.mxu0
      %479 = vdwg.mxu0
      %v480 = vadd.f32 %v474, %v477
      %v481 = vrot.slane %v480, 4
      %v482 = vadd.f32 %v480, %v481
      %v483 = vrot.slane %v482, 2
      %v484 = vadd.f32 %v482, %v483
      %v485 = vrot.slane %v484, 1
      %v486 = vadd.f32 %v484, %v485
      %v487 = vmul.f32 %v486, 0.125
      %v488 = vmul.f32 %v474, %v474
      %v489 = vmul.f32 %v477, %v477
      %v490 = vadd.f32 %v488, %v489
      %v491 = vrot.slane %v490, 4
      %v492 = vadd.f32 %v490, %v491
      %v493 = vrot.slane %v492, 2
      %v494 = vadd.f32 %v492, %v493
      %v495 = vrot.slane %v494, 1
      %v496 = vadd.f32 %v494, %v495
      %v497 = vmul.f32 %v496, 0.125
      %v498 = vmul.f32 %v487, %v487
      %v499 = vsub.f32 %v497, %v498
      %v500 = vmax.f32 %v499, 0.0
      %v501 = vsub.f32 %v474, %v487
      %v502 = vsub.f32 %v477, %v487
      %v503 = vadd.f32 %v500, 1e-05
      %v504 = vrsqrt.pop %v503
      %v505 = vld [vmem:[%s326] sm:$0x1]
      %v506 = vmul.f32 %v504, %v505
      %v507 = vlaneseq
      %v508 = vshrl.u32 %v507, 7
      %v509 = vsub.s32 0, %v508
      %v510 = vrot.slane %v506, %v509
      %v511 = vmul.f32 %v501, %v510
      %v512 = vmul.f32 %v502, %v510
      %v513 = vld [vmem:[%s332] sm:$0x1]
      %v515 = vlaneseq
      %v516 = vshrl.u32 %v515, 7
      %v517 = vsub.s32 0, %v516
      %v518 = vrot.slane %v513, %v517
      %v520 = vadd.f32 %v511, %v518
      %v521 = vadd.f32 %v512, %v518
      %v522 = vmax.f32 %v520, 0.0
      %v523 = vmax.f32 %v521, 0.0
      %p524 = scmp.eq.s32.totalorder %s22, 1
      %p525 = por %p335, %p524
      %p526 = scmp.eq.s32.totalorder %s22, 3
      %p527 = por %p525, %p526
      %v528 = vlaneseq
      %v529 = vshrl.u32 %v528, 7
      %v530 = vadd.s32 %v529, 8
      %s531 = scalar_select %p527, 1, 0
      %v532 = vstv %s531
      %vm533 = vcmp.eq.s32.totalorder %v532, 1
      %v534 = vsel %vm533, %v522, %v474
      %v535 = vsel %vm533, %v523, %v477
      %vm536 = vcmp.lt.s32.totalorder %v529, 8
      %vm537 = vcmp.lt.s32.totalorder %v530, 8
      %v538 = vsel %vm536, %v534, 0.0
      %v539 = vsel %vm537, %v535, 0.0
      %v540 = vpack.c.bf16 %v539, %v538
      %p541 = scmp.eq.s32.totalorder %s356, 0
      // Predicated region
      $region45: #{siam_mlp_forward.1} parent=39 // pred_check
        %p542 = pneg %p541
      $region46: #{siam_mlp_forward.1} parent=39 // pred_check_branch
        %544 = sbr.rel (%p542) target = $region48
      $region47: #{siam_mlp_forward.1} parent=39 // pred_region
        %v546 = vunpack.c.l.b16 %v540
        %v547 = vunpack.c.h.b16 %v540
        %v548 = vpack.c.b16 %v546, %v546
        %v549 = vpack.c.b16 %v547, %v547
        %s552 = sshra.s32 %s334, 7
        %s553 = sand.u32 %s334, 127
        %s554 = sadd.s32 %s552, 2
        %s555 = smul.addr %s554, 4
        %s556 = scalar_lea.vmem [#allocation2], %s555
        %557 = vst [vmem:[%s556] sm:$0xf] %v548
        %558 = vst [vmem:[%s556 + $0x4] sm:$0xf] %v549
      $region48: #{siam_mlp_forward.1} parent=39 // pred_fallthru
        _
      %p559 = scmp.eq.s32.totalorder %s356, 1
      // Predicated region
      $region49: #{siam_mlp_forward.1} parent=39 // pred_check
        %p560 = pneg %p559
      $region50: #{siam_mlp_forward.1} parent=39 // pred_check_branch
        %562 = sbr.rel (%p560) target = $region52
      $region51: #{siam_mlp_forward.1} parent=39 // pred_region
        %v564 = vunpack.c.l.b16 %v540
        %v565 = vunpack.c.h.b16 %v540
        %v566 = vpack.c.b16 %v564, %v564
        %v567 = vpack.c.b16 %v565, %v565
        %s570 = sshra.s32 %s334, 7
        %s571 = sand.u32 %s334, 127
        %s572 = smul.addr %s570, 4
        %s573 = scalar_lea.vmem [#allocation2], %s572
        %574 = vst [vmem:[%s573] sm:$0xf] %v566
        %575 = vst [vmem:[%s573 + $0x4] sm:$0xf] %v567
      $region52: #{siam_mlp_forward.1} parent=39 // pred_fallthru
        _
      %p576 = scmp.eq.s32.totalorder %s22, 2
      // Predicated region
      $region53: #{siam_mlp_forward.1} parent=39 // pred_check
        %p577 = pneg %p576
      $region54: #{siam_mlp_forward.1} parent=39 // pred_check_branch
        %579 = sbr.rel (%p577) target = $region56
      $region55: #{siam_mlp_forward.1} parent=39 // pred_region
        %s580 = sshra.s32 %s334, 7
        %s581 = sand.u32 %s334, 127
        %s582 = scalar_lea.vmem %s5, %s580
        %583 = vst [vmem:[%s582] sm:$0xff] %v538
        %584 = vst [vmem:[%s582 + $0x8] sm:$0xff] %v539
      $region56: #{siam_mlp_forward.1} parent=39 // pred_fallthru
        _
      %p585 = scmp.eq.s32.totalorder %s22, 4
      // Predicated region
      $region57: #{siam_mlp_forward.1} parent=39 // pred_check
        %p586 = pneg %p585
      $region58: #{siam_mlp_forward.1} parent=39 // pred_check_branch
        %588 = sbr.rel (%p586) target = $region60
      $region59: #{siam_mlp_forward.1} parent=39 // pred_region
        %s589 = sshra.s32 %s334, 7
        %s590 = sand.u32 %s334, 127
        %s591 = scalar_lea.vmem %s6, %s589
        %592 = vst [vmem:[%s591] sm:$0xff] %v538
        %593 = vst [vmem:[%s591 + $0x8] sm:$0xff] %v539
      $region60: #{siam_mlp_forward.1} parent=39 // pred_fallthru
        _
      // Predicated region
      $region61: #{siam_mlp_forward.1} parent=39 // pred_check
        %p594 = pneg %p176
      $region62: #{siam_mlp_forward.1} parent=39 // pred_check_branch
        %596 = sbr.rel (%p594) target = $region64
      $region63: #{siam_mlp_forward.1} parent=39 // pred_region
        _
      $region64: #{siam_mlp_forward.1} parent=39 // pred_fallthru
        _
      // Predicated region
      $region65: #{siam_mlp_forward.1} parent=39 // pred_check
        %p597 = pneg %p197
      $region66: #{siam_mlp_forward.1} parent=39 // pred_check_branch
        %599 = sbr.rel (%p597) target = $region68
      $region67: #{siam_mlp_forward.1} parent=39 // pred_region
        _
      $region68: #{siam_mlp_forward.1} parent=39 // pred_fallthru
        _
      // Predicated region
      $region69: #{siam_mlp_forward.1} parent=39 // pred_check
        %p600 = pneg %p176
      $region70: #{siam_mlp_forward.1} parent=39 // pred_check_branch
        %602 = sbr.rel (%p600) target = $region72
      $region71: #{siam_mlp_forward.1} parent=39 // pred_region
        _
      $region72: #{siam_mlp_forward.1} parent=39 // pred_fallthru
        _
      // Predicated region
      $region73: #{siam_mlp_forward.1} parent=39 // pred_check
        %p603 = pneg %p197
      $region74: #{siam_mlp_forward.1} parent=39 // pred_check_branch
        %605 = sbr.rel (%p603) target = $region76
      $region75: #{siam_mlp_forward.1} parent=39 // pred_region
        _
      $region76: #{siam_mlp_forward.1} parent=39 // pred_fallthru
        _
    $region40: #{siam_mlp_forward.1} parent=5 // pred_fallthru
      _
    %p606 = scmp.le.s32.totalorder 2, %s13
    // Predicated region
    $region77: #{siam_mlp_forward.1} parent=5 // pred_check
      %p607 = pneg %p606
    $region78: #{siam_mlp_forward.1} parent=5 // pred_check_branch
      %609 = sbr.rel (%p607) target = $region80
    $region79: #{siam_mlp_forward.1} parent=5 // pred_region
      %s610 = ssub.s32 %s13, 2
    $region80: #{siam_mlp_forward.1} parent=5 // pred_fallthru
      _
  $region6: #{siam_mlp_forward.1} parent=0 // loop_footer
    %s17 = sadd.s32 1, %s13
  $region7: #{siam_mlp_forward.1} parent=0 // loop_footer_branch
    %12 = sbr.rel target = $region3
  $region8: #{siam_mlp_forward.1} parent=0 // loop_exit
    _

</llo_original>
